<compile_context>
chip_gen: v7x
topology: tpu7x:2x2x1
jax: 0.10.0
libtpu: 0.0.40
codegen_flags: <defaults>
</compile_context>

<pallas_src>
import jax
import jax.numpy as jnp
from jax.experimental import pallas as pl
from jax.experimental.pallas import tpu as pltpu

INPUT_SIZE = 39
OUTPUT_SIZE = 1

DEFAULT_BLOCK_B = 8192      # max rows per tile (multiple of 8 and 128)
TARGET_GRID_STEPS = 8       # aim for >=8 grid steps: pipeline depth + 2 v7x TCs
_PALLAS_MIN_BATCH = 32768   # below this, the plain XLA dot beats custom-call cost


def _round_up(n: int, m: int) -> int:
    return ((n + m - 1) // m) * m


def _choose_block_b(B: int) -> int:
    """Pick a tile so there are ~TARGET_GRID_STEPS grid steps, capped for VMEM."""
    block = _round_up(pl.cdiv(B, TARGET_GRID_STEPS), 8)
    block = max(8, min(block, DEFAULT_BLOCK_B))
    if block >= 128:
        # Keep the output-row width a multiple of 128 lanes (dense stores).
        block = min(_round_up(block, 128), DEFAULT_BLOCK_B)
    return block


def _linear_kernel(x_ref, w_ref, b_ref, o_ref):
    # x_ref: (block_b, 39) VMEM   w_ref: (1, 39) VMEM   b_ref: (1,) SMEM
    # o_ref: (1, block_b)  VMEM (lane-dense output row)
    x = x_ref[...].astype(jnp.float32)               # in-register upcast if needed
    w = w_ref[...].astype(jnp.float32)                # (1, 39) broadcast row
    b = b_ref[0]                                      # scalar bias from SMEM
    # VPU multiply (sublane-broadcast of the weight row) + XLU lane reduce.
    acc = jnp.sum(x * w, axis=-1)                     # (block_b,) f32
    # (block_b,) -> (1, block_b): small relayout, hides under the DMA shadow.
    o_ref[...] = (acc + b).reshape(1, -1).astype(o_ref.dtype)


def baseline_forward_pallas(x, weight, bias, *, block_b=None):
    """
    x:      (B, 39)  float32 (or bf16; upcast in-kernel)
    weight: (1, 39)  float32 (PyTorch nn.Linear convention)
    bias:   (1,)     float32
    returns (B, 1)   float32
    """
    B = x.shape[0]
    assert x.shape[1] == INPUT_SIZE, x.shape
    if block_b is None:
        block_b = _choose_block_b(B)
    grid_b = pl.cdiv(B, block_b)

    w = weight.reshape(OUTPUT_SIZE, INPUT_SIZE).astype(jnp.float32)
    b = bias.reshape(OUTPUT_SIZE).astype(jnp.float32)

    bytes_accessed = (
        B * INPUT_SIZE * x.dtype.itemsize      # x read
        + INPUT_SIZE * 4 + 4                   # weight + bias
        + grid_b * block_b * 4                 # output write (incl. edge pad)
    )

    out2d = pl.pallas_call(
        _linear_kernel,
        out_shape=jax.ShapeDtypeStruct((grid_b, block_b), jnp.float32),
        grid=(grid_b,),
        in_specs=[
            # Batch-tiled x: double-buffered DMA pipelining across the grid.
            pl.BlockSpec((block_b, INPUT_SIZE), lambda i: (i, 0)),
            # Weight row: constant block across the grid (stays VMEM-resident).
            pl.BlockSpec((OUTPUT_SIZE, INPUT_SIZE), lambda i: (0, 0)),
            # Bias: single 32-bit scalar in SMEM, no vector-memory tile.
            pl.BlockSpec(memory_space=pltpu.MemorySpace.SMEM),
        ],
        # Lane-dense output row (biggest single out_spec lever).
        out_specs=pl.BlockSpec((1, block_b), lambda i: (i, 0)),
        compiler_params=pltpu.CompilerParams(
            # Batch tiles are independent -> shard across v7x's 2 TensorCores.
            dimension_semantics=("parallel",),
            # Footprint @ block_b=8192: ~8.5 MiB tiles + temporaries; 32 MiB is
            # safe under the scoped defaults of v5e/v6e and v7x alike.
            vmem_limit_bytes=32 * 1024 * 1024,
        ),
        cost_estimate=pl.CostEstimate(
            flops=2 * B * INPUT_SIZE,
            transcendentals=0,
            bytes_accessed=bytes_accessed,
        ),
    )(x, w, b)

    # Row-major flatten restores the original batch order; slice off the padded
    # tail rows of the last tile (garbage rows computed in the masked region).
    return out2d.reshape(grid_b * block_b, OUTPUT_SIZE)[:B]


def baseline_forward(x, weight, bias):
    """Module-equivalent forward. Small/medium batches go straight to XLA
    (the whole op is a few µs of HBM traffic; custom-call overhead dominates)."""
    if x.shape[0] < _PALLAS_MIN_BATCH:
        return x @ weight.T + bias            # fused XLA dot, (B, 1)
    return baseline_forward_pallas(x, weight, bias)


def _init_params(key):
    # Deterministic init mimicking nn.Linear default: U(-1/sqrt(in), 1/sqrt(in)).
    k_w, k_b = jax.random.split(key)
    bound = 1.0 / jnp.sqrt(jnp.float32(INPUT_SIZE))
    weight = jax.random.uniform(
        k_w, (OUTPUT_SIZE, INPUT_SIZE), jnp.float32, minval=-bound, maxval=bound
    )
    bias = jax.random.uniform(
        k_b, (OUTPUT_SIZE,), jnp.float32, minval=-bound, maxval=bound
    )
    return weight, bias


if __name__ == "__main__":
    key = jax.random.PRNGKey(0)
    k_x1, k_x2, k_x3, k_p = jax.random.split(key, 4)
    weight, bias = _init_params(k_p)

    ref = lambda x: x @ weight.T + bias

    # 1) Small batch consistent with the module (B=8, 39 features): single tile.
    x_small = jax.random.normal(k_x1, (8, INPUT_SIZE), jnp.float32)
    out_small = jax.block_until_ready(baseline_forward_pallas(x_small, weight, bias))
    assert out_small.shape == (8, OUTPUT_SIZE), out_small.shape
    assert jnp.allclose(out_small, ref(x_small), atol=1e-5, rtol=1e-5), "small mismatch"

    # 2) Batch not a multiple of the tile: exercises the masked edge block and
    #    the wrapper-side reshape/slice of the lane-dense output.
    x_ragged = jax.random.normal(k_x2, (100, INPUT_SIZE), jnp.float32)
    out_ragged = jax.block_until_ready(baseline_forward_pallas(x_ragged, weight, bias))
    assert out_ragged.shape == (100, OUTPUT_SIZE), out_ragged.shape
    assert jnp.allclose(out_ragged, ref(x_ragged), atol=1e-5, rtol=1e-5), "ragged mismatch"

    # 3) Multi-tile batch, auto-chosen tile (~8 grid steps, megacore-parallel).
    x_big = jax.random.normal(k_x3, (4096, INPUT_SIZE), jnp.float32)
    out_big = jax.block_until_ready(baseline_forward_pallas(x_big, weight, bias))
    assert out_big.shape == (4096, OUTPUT_SIZE), out_big.shape
    assert jnp.allclose(out_big, ref(x_big), atol=1e-5, rtol=1e-5), "big mismatch"

    # 4) Explicit tile override (grid of 4 full tiles).
    out_big2 = jax.block_until_ready(
        baseline_forward_pallas(x_big, weight, bias, block_b=1024)
    )
    assert jnp.allclose(out_big2, ref(x_big), atol=1e-5, rtol=1e-5), "tiled mismatch"

    # 5) Dispatcher sanity: small batch falls through to the XLA fast path.
    out_dispatch = jax.block_until_ready(baseline_forward(x_small, weight, bias))
    assert jnp.allclose(out_dispatch, ref(x_small), atol=1e-5, rtol=1e-5), "dispatch mismatch"

    print("KERNEL_OK")
</pallas_src>

<mosaic_0001>
module attributes {stable_mosaic.version = 11 : i64} {
  func.func @_linear_kernel(%arg0: i32, %arg1: memref<8x39xf32, #tpu.memory_space<vmem>>, %arg2: memref<1x39xf32, #tpu.memory_space<vmem>>, %arg3: memref<1xf32, #tpu.memory_space<smem>>, %arg4: memref<1x8xf32, #tpu.memory_space<vmem>>) attributes {dimension_semantics = [#tpu.dimension_semantics<parallel>], iteration_bounds = array<i64: 1>, scalar_prefetch = 0 : i64, scratch_operands = 0 : i64, tpu.core_type = #tpu.core_type<tc>, window_params = [{transform_indices = @transform_0, window_bounds = array<i64: 8, 39>}, {pipeline_mode = #tpu.pipeline_mode<synchronous>, transform_indices = @transform_1, window_bounds = array<i64: 1, 39>}, {transform_indices = @transform_2, window_bounds = array<i64: 1>}, {transform_indices = @transform_3, window_bounds = array<i64: 1, 8>}]} {
    %c0 = arith.constant 0 : index
    %c0_0 = arith.constant 0 : index
    %0 = vector.load %arg1[%c0, %c0_0] : memref<8x39xf32, #tpu.memory_space<vmem>>, vector<8x39xf32>
    %c0_1 = arith.constant 0 : index
    %c0_2 = arith.constant 0 : index
    %1 = vector.load %arg2[%c0_1, %c0_2] : memref<1x39xf32, #tpu.memory_space<vmem>>, vector<1x39xf32>
    %c0_3 = arith.constant 0 : index
    %2 = memref.load %arg3[%c0_3] : memref<1xf32, #tpu.memory_space<smem>>
    %3 = vector.broadcast %1 : vector<1x39xf32> to vector<8x39xf32>
    %4 = arith.mulf %0, %3 : vector<8x39xf32>
    %cst = arith.constant dense<0.000000e+00> : vector<8xf32>
    %5 = vector.multi_reduction <add>, %4, %cst [1] : vector<8x39xf32> to vector<8xf32>
    %6 = vector.broadcast %2 : f32 to vector<8xf32>
    %7 = arith.addf %5, %6 : vector<8xf32>
    %8 = vector.shape_cast %7 : vector<8xf32> to vector<1x8xf32>
    %c0_4 = arith.constant 0 : index
    %c0_5 = arith.constant 0 : index
    %9 = vector.load %arg4[%c0_4, %c0_5] : memref<1x8xf32, #tpu.memory_space<vmem>>, vector<1x8xf32>
    tpu.vector_store %arg4[%c0_4, %c0_5], %8 {strides = array<i32>} : memref<1x8xf32, #tpu.memory_space<vmem>>, vector<1x8xf32>,
    return
  }
  func.func @transform_0(%arg0: i32) -> (i32, i32) {
    %c0_i32 = arith.constant 0 : i32
    %c0_i32_0 = arith.constant 0 : i32
    return %arg0, %c0_i32 : i32, i32
  }
  func.func @transform_1(%arg0: i32) -> (i32, i32) {
    %c0_i32 = arith.constant 0 : i32
    %c0_i32_0 = arith.constant 0 : i32
    %c0_i32_1 = arith.constant 0 : i32
    return %c0_i32, %c0_i32_0 : i32, i32
  }
  func.func @transform_2(%arg0: i32) -> i32 {
    %c0_i32 = arith.constant 0 : i32
    %c0_i32_0 = arith.constant 0 : i32
    return %c0_i32 : i32
  }
  func.func @transform_3(%arg0: i32) -> (i32, i32) {
    %c0_i32 = arith.constant 0 : i32
    %c0_i32_0 = arith.constant 0 : i32
    return %arg0, %c0_i32 : i32, i32
  }
}

</mosaic_0001>

<llo_original>
// kernel: tpu_custom_call.1
$region0: #{tpu_custom_call.1}
  #allocation0 [shape = 'u32[]', space=smem, size = 0x4, offset = 0x4, fixed_abs, tag = 'smem constant byte address 0x4 - core index']
  #allocation1 [shape = 'u32[144,128]{1,0:T(1,128)}', space=vmem, size = 0x12000, scoped, tag = 'internal scratch']
  #allocation2 [shape = 'f32[1]{0:T(128)S(6)}', space=smem, size = 0x200, scoped, tag = 'scoped memory for tpu_custom_call.1']
  %s0 = inlined_call_operand.hbm [shape: f32[8,39], index: 0, kind: input, shape index: {}]
  %s1 = inlined_call_operand.vmem [shape: f32[1,39], index: 1, kind: input, shape index: {}]
  %s2 = inlined_call_operand.<no memory space> [shape: f32[1], index: 2, kind: input, shape index: {}]
  %s3 = inlined_call_operand.hbm [shape: f32[1,8], index: 3, kind: output, shape index: {}]
  %s4 = sld [smem:[#allocation0]]
  $region26: #{tpu_custom_call.1} parent=0
    _
  %s6 = ssub.s32 1, %s4
  %s7 = scalar_select 0, %s6, %s4
  %8 = sst [smem:[#allocation2]] %s2
  $region1: #{tpu_custom_call.1} parent=0
    #allocation3 [shape = 'u8[4096]{0}', space=vmem, size = 0x1000, scoped, tag = 'input window, operand 0, single buffered']
    #allocation4 [shape = 's32[1]{0}', space=sflag, size = 0x4, scoped, tag = 'scoped memory for tpu_custom_call.1']
    #allocation5 [shape = 's32[1]{0}', space=sflag, size = 0x4, scoped, tag = 'scoped memory for tpu_custom_call.1']
    #allocation6 [shape = 'u8[512]{0}', space=vmem, size = 0x400, scoped, tag = 'output window, operand 0, single buffered']
    %9 = vsyncpa [#allocation4], 0
    %10 = vsyncpa [#allocation5], 0
    // Predicated region
    $region2: #{tpu_custom_call.1} parent=1 // pred_check
      _
    $region3: #{tpu_custom_call.1} parent=1 // pred_check_branch
      %12 = sbr.rel (0) target = $region5
    $region4: #{tpu_custom_call.1} parent=1 // pred_region
      %s14 = ssub.s32 128, 128
      %15 = vsyncadd [#allocation4], %s14
      %s17 = sshll.u32 [#allocation3], 4
      %s18 = int_to_ptr.vmem [resolvable:$true] %s17
      %20 = dma.hbm_to_vmem [thread:$0]  %s0, 128, %s18, [#allocation4]
    $region5: #{tpu_custom_call.1} parent=1 // pred_fallthru
      _
    // Predicated region
    $region6: #{tpu_custom_call.1} parent=1 // pred_check
      _
    $region7: #{tpu_custom_call.1} parent=1 // pred_check_branch
      %22 = sbr.rel (0) target = $region9
    $region8: #{tpu_custom_call.1} parent=1 // pred_region
      _
    $region9: #{tpu_custom_call.1} parent=1 // pred_fallthru
      _
    // Predicated region
    $region10: #{tpu_custom_call.1} parent=1 // pred_check
      _
    $region11: #{tpu_custom_call.1} parent=1 // pred_check_branch
      %24 = sbr.rel (0) target = $region13
    $region12: #{tpu_custom_call.1} parent=1 // pred_region
      _
    $region13: #{tpu_custom_call.1} parent=1 // pred_fallthru
      _
    // Predicated region
    $region14: #{tpu_custom_call.1} parent=1 // pred_check
      _
    $region15: #{tpu_custom_call.1} parent=1 // pred_check_branch
      %26 = sbr.rel (0) target = $region17
    $region16: #{tpu_custom_call.1} parent=1 // pred_region
      %27 = dma.done [#allocation4], 128
    $region17: #{tpu_custom_call.1} parent=1 // pred_fallthru
      _
    %v28 = vld [vmem:[#allocation3] sm:$0xff]
    %v29 = vld [vmem:[%s1] sm:$0x1]
    %s30 = sld [smem:[#allocation2]]
    %v32 = vlaneseq
    %v33 = vshrl.u32 %v32, 7
    %v34 = vsub.s32 0, %v33
    %v35 = vrot.slane %v29, %v34
    %v37 = vmul.f32 %v28, %v35
    %vm38 = vcmask 318464
    %v39 = vsel %vm38, %v37, 0.0
    %40 = vadd.xlane.f32.xlu0 %v39
    %v41 = vpop.xlane.xlu0 %40
    %v42 = vstv %s30
    %v43 = vadd.f32 %v41, %v42
    %v45 = vlaneseq
    %v46 = vand.u32 %v45, 127
    %v47 = vlaneseq
    %v48 = vshrl.u32 %v47, 7
    %v49 = vsub.s32 %v46, %v48
    %v50 = vrot.slane %v43, %v49
    %vm52 = vcmask 57344
    %53 = vst.msk [vmem:[#allocation6] sm:$0x1] %vm52, %v50
    // Predicated region
    $region18: #{tpu_custom_call.1} parent=1 // pred_check
      _
    $region19: #{tpu_custom_call.1} parent=1 // pred_check_branch
      %55 = sbr.rel (0) target = $region21
    $region20: #{tpu_custom_call.1} parent=1 // pred_region
      %s57 = ssub.s32 16, 16
      %58 = vsyncadd [#allocation5], %s57
      %s60 = sshll.u32 [#allocation6], 4
      %s61 = int_to_ptr.vmem [resolvable:$true] %s60
      %63 = dma.vmem_to_hbm [thread:$0]  %s61, 16, %s3, [#allocation5]
    $region21: #{tpu_custom_call.1} parent=1 // pred_fallthru
      _
    // Predicated region
    $region22: #{tpu_custom_call.1} parent=1 // pred_check
      _
    $region23: #{tpu_custom_call.1} parent=1 // pred_check_branch
      %65 = sbr.rel (0) target = $region25
    $region24: #{tpu_custom_call.1} parent=1 // pred_region
      %66 = dma.done [#allocation5], 16
    $region25: #{tpu_custom_call.1} parent=1 // pred_fallthru
      _
    %67 = vsyncpa [#allocation4], 1
    %68 = vsyncpa [#allocation5], 1

</llo_original>
